<compile_context>
chip_gen: v7x
topology: tpu7x:2x2x1
jax: 0.10.0
libtpu: 0.0.40
codegen_flags: <defaults>
</compile_context>

<pallas_src>
import functools
import math

import jax
import jax.numpy as jnp
from jax import lax
from jax.experimental import pallas as pl
from jax.experimental.pallas import tpu as pltpu


def _round_up(x, mult):
    return (x + mult - 1) // mult * mult


def fuzzy_arcface_kernel(lbl_ref, x_ref, w_ref, o_ref, *,
                         s, m, tau, easy_margin, tn):
    # x_ref: (tb, K)  pre-normalized input rows (compute dtype)
    # w_ref: (K, tn)  pre-normalized weight columns (compute dtype)
    # lbl_ref: (tb, 1) int32        o_ref: (tb, tn) float32
    cosine = jnp.dot(x_ref[...], w_ref[...],
                     preferred_element_type=jnp.float32)          # MXU, f32 acc

    tb = cosine.shape[0]
    col = pl.program_id(1) * tn + lax.broadcasted_iota(jnp.int32, (tb, tn), 1)
    one_hot = (col == lbl_ref[...]).astype(jnp.float32)           # (tb, tn)

    # Gather cosine at each row's label column (0.0 if label not in this tile).
    cos_label = jnp.sum(one_hot * cosine, axis=1, keepdims=True)  # (tb, 1)

    # All margin math only on the (tb, 1) label column.
    mask = jnp.logical_and(
        jnp.logical_and(cos_label > 0.0, cos_label >= tau), cos_label <= 1.0)
    fuzzy = jnp.where(mask, cos_label, jnp.ones_like(cos_label))
    m_adj = m * fuzzy
    cos_m = jnp.cos(m_adj)
    sin_m = jnp.sin(m_adj)
    # Clamp to avoid NaN from roundoff; original math unchanged when |cos|<=1.
    sine = jnp.sqrt(jnp.maximum(1.0 - cos_label * cos_label, 0.0))
    phi = cos_label * cos_m - sine * sin_m
    if easy_margin:
        phi = jnp.where(cos_label > 0.0, phi, cos_label)
    else:
        # cos(pi - m_adj) = -cos(m_adj);  sin(pi - m_adj) = sin(m_adj)
        phi = jnp.where(cos_label > -cos_m, phi, cos_label - sin_m * m_adj)

    # o = s * (one_hot * phi + (1 - one_hot) * cosine)
    #   = s * cosine + one_hot * s * (phi - cos_label)
    o_ref[...] = s * cosine + one_hot * (s * (phi - cos_label))


def fuzzy_arcface_forward(x, label, weight, *, s=64.0, m=0.5, tau=0.5,
                          easy_margin=False, tb=None, tn=None,
                          compute_dtype=jnp.bfloat16):
    B, K = x.shape
    Kw, N = weight.shape
    assert K == Kw, "in_features mismatch"

    # ---- one-time parameter / input glue (outside the tiled loop) ----------
    # F.normalize(weight) with default dim=1 on (in_features, out_features):
    # normalize each ROW over the out_features axis (faithful to the module).
    wn = weight / jnp.maximum(
        jnp.sqrt(jnp.sum(weight * weight, axis=1, keepdims=True)), 1e-12)
    # F.normalize(input): row-normalize over in_features.
    xn = x / jnp.maximum(
        jnp.sqrt(jnp.sum(x * x, axis=1, keepdims=True)), 1e-12)

    xn = xn.astype(compute_dtype)
    wn = wn.astype(compute_dtype)
    lbl = label.astype(jnp.int32).reshape(B, 1)

    # ---- tiling: MXU-friendly, lane-aligned, padded -------------------------
    if tb is None:
        tb = min(256, _round_up(B, 8))      # >=8-sublane aligned batch tile
    if tn is None:
        tn = min(512, _round_up(N, 128))    # lane-dense output tile
    B_pad = _round_up(B, tb)
    N_pad = _round_up(N, tn)

    if B_pad != B:
        xn = jnp.pad(xn, ((0, B_pad - B), (0, 0)))
        lbl = jnp.pad(lbl, ((0, B_pad - B), (0, 0)))
    if N_pad != N:
        wn = jnp.pad(wn, ((0, 0), (0, N_pad - N)))

    kernel = functools.partial(
        fuzzy_arcface_kernel, s=float(s), m=float(m), tau=float(tau),
        easy_margin=bool(easy_margin), tn=tn)

    out = pl.pallas_call(
        kernel,
        out_shape=jax.ShapeDtypeStruct((B_pad, N_pad), jnp.float32),
        grid_spec=pltpu.PrefetchScalarGridSpec(
            num_scalar_prefetch=0,
            grid=(B_pad // tb, N_pad // tn),
            in_specs=[
                pl.BlockSpec((tb, 1), lambda i, j: (i, 0)),   # labels
                pl.BlockSpec((tb, K), lambda i, j: (i, 0)),   # normalized x
                pl.BlockSpec((K, tn), lambda i, j: (0, j)),   # normalized W
            ],
            out_specs=pl.BlockSpec((tb, tn), lambda i, j: (i, j)),
        ),
        compiler_params=pltpu.CompilerParams(
            dimension_semantics=("parallel", "parallel")),
    )(lbl, xn, wn)

    return out[:B, :N]


def _reference(x, label, weight, *, s=64.0, m=0.5, tau=0.5, easy_margin=False):
    # pure-JAX f32 replica of the PyTorch forward, for validation
    xn = x / jnp.maximum(jnp.linalg.norm(x, axis=1, keepdims=True), 1e-12)
    wn = weight / jnp.maximum(jnp.linalg.norm(weight, axis=1, keepdims=True), 1e-12)
    cosine = xn @ wn
    mask = (cosine > 0) & (cosine >= tau) & (cosine <= 1)
    fm = jnp.where(mask, cosine, jnp.ones_like(cosine))
    m_adj = m * fm
    sine = jnp.sqrt(1.0 - cosine ** 2)
    phi = cosine * jnp.cos(m_adj) - sine * jnp.sin(m_adj)
    if easy_margin:
        phi = jnp.where(cosine > 0, phi, cosine)
    else:
        phi = jnp.where(cosine > jnp.cos(jnp.pi - m_adj),
                        phi, cosine - jnp.sin(jnp.pi - m_adj) * m_adj)
    one_hot = jax.nn.one_hot(label, cosine.shape[1], dtype=cosine.dtype)
    return s * (one_hot * phi + (1.0 - one_hot) * cosine)


if __name__ == "__main__":
    # Small stand-ins for (in_features=768, out_features=5749).  B and
    # OUT_FEATURES are deliberately NOT tile-aligned to exercise padding.
    B, IN_FEATURES, OUT_FEATURES = 10, 64, 500
    SCALE_S, MARGIN, TAU = 64.0, 0.5, 0.5

    key = jax.random.PRNGKey(0)
    kx, kw, kl = jax.random.split(key, 3)

    x = jax.random.normal(kx, (B, IN_FEATURES), dtype=jnp.float32)
    label = jax.random.randint(kl, (B,), 0, OUT_FEATURES, dtype=jnp.int32)

    # nn.init.xavier_uniform_ on (in_features, out_features)
    bound = math.sqrt(6.0 / (IN_FEATURES + OUT_FEATURES))
    weight = jax.random.uniform(
        kw, (IN_FEATURES, OUT_FEATURES), dtype=jnp.float32,
        minval=-bound, maxval=bound)

    ref = _reference(x, label, weight, s=SCALE_S, m=MARGIN, tau=TAU)

    # 1) f32 compute path: must match the f32 reference tightly.
    out_f32 = fuzzy_arcface_forward(x, label, weight, s=SCALE_S, m=MARGIN,
                                    tau=TAU, compute_dtype=jnp.float32)
    out_f32 = jax.block_until_ready(out_f32)
    assert out_f32.shape == (B, OUT_FEATURES)
    assert jnp.allclose(out_f32, ref, atol=2e-3, rtol=1e-3), "f32 mismatch"

    # 2) default bf16 matmul path (perf config): matches f32 reference to the
    #    precision expected from bf16 inputs scaled by s=64.
    out_bf16 = fuzzy_arcface_forward(x, label, weight, s=SCALE_S, m=MARGIN,
                                     tau=TAU)
    out_bf16 = jax.block_until_ready(out_bf16)
    assert out_bf16.shape == (B, OUT_FEATURES)
    assert jnp.allclose(out_bf16, ref, atol=2.5e-1, rtol=2e-2), "bf16 mismatch"

    print("KERNEL_OK")
</pallas_src>

<mosaic_0001>
module attributes {stable_mosaic.version = 11 : i64} {
  func.func @fuzzy_arcface_kernel(%arg0: i32, %arg1: i32, %arg2: memref<16x1xi32, #tpu.memory_space<vmem>>, %arg3: memref<16x64xf32, #tpu.memory_space<vmem>>, %arg4: memref<64x512xf32, #tpu.memory_space<vmem>>, %arg5: memref<16x512xf32, #tpu.memory_space<vmem>>) attributes {dimension_semantics = [#tpu.dimension_semantics<parallel>, #tpu.dimension_semantics<parallel>], iteration_bounds = array<i64: 1, 1>, scalar_prefetch = 0 : i64, scratch_operands = 0 : i64, tpu.core_type = #tpu.core_type<tc>, window_params = [{transform_indices = @transform_0, window_bounds = array<i64: 16, 1>}, {transform_indices = @transform_1, window_bounds = array<i64: 16, 64>}, {transform_indices = @transform_2, window_bounds = array<i64: 64, 512>}, {transform_indices = @transform_3, window_bounds = array<i64: 16, 512>}]} {
    %c0 = arith.constant 0 : index
    %c0_0 = arith.constant 0 : index
    %0 = vector.load %arg3[%c0, %c0_0] : memref<16x64xf32, #tpu.memory_space<vmem>>, vector<16x64xf32>
    %c0_1 = arith.constant 0 : index
    %c0_2 = arith.constant 0 : index
    %1 = vector.load %arg4[%c0_1, %c0_2] : memref<64x512xf32, #tpu.memory_space<vmem>>, vector<64x512xf32>
    %cst = arith.constant dense<0.000000e+00> : vector<16x512xf32>
    %2 = tpu.matmul %0, %1, %cst {dimension_numbers = #tpu.dot_dimension_numbers<[1], [0], [0], [1], [0, 0, 1, 1], [], []>} : vector<16x64xf32>, vector<64x512xf32>, vector<16x512xf32> -> vector<16x512xf32>
    %c512_i32 = arith.constant 512 : i32
    %3 = arith.muli %arg1, %c512_i32 : i32
    %4 = tpu.iota {dimensions = array<i32: 1>} : vector<16x512xi32>
    %5 = vector.broadcast %3 : i32 to vector<16x512xi32>
    %6 = arith.addi %5, %4 : vector<16x512xi32>
    %c0_3 = arith.constant 0 : index
    %c0_4 = arith.constant 0 : index
    %7 = vector.load %arg2[%c0_3, %c0_4] : memref<16x1xi32, #tpu.memory_space<vmem>>, vector<16x1xi32>
    %8 = vector.broadcast %7 : vector<16x1xi32> to vector<16x512xi32>
    %9 = arith.cmpi eq, %6, %8 : vector<16x512xi32>
    %10 = arith.extui %9 : vector<16x512xi1> to vector<16x512xi32>
    %11 = arith.sitofp %10 : vector<16x512xi32> to vector<16x512xf32>
    %12 = arith.mulf %11, %2 : vector<16x512xf32>
    %cst_5 = arith.constant dense<0.000000e+00> : vector<16xf32>
    %13 = vector.multi_reduction <add>, %12, %cst_5 [1] : vector<16x512xf32> to vector<16xf32>
    %14 = vector.shape_cast %13 : vector<16xf32> to vector<16x1xf32>
    %cst_6 = arith.constant 0.000000e+00 : f32
    %15 = vector.broadcast %cst_6 : f32 to vector<16x1xf32>
    %16 = arith.cmpf ogt, %14, %15 : vector<16x1xf32>
    %cst_7 = arith.constant 5.000000e-01 : f32
    %17 = vector.broadcast %cst_7 : f32 to vector<16x1xf32>
    %18 = arith.cmpf oge, %14, %17 : vector<16x1xf32>
    %19 = arith.andi %16, %18 : vector<16x1xi1>
    %cst_8 = arith.constant 1.000000e+00 : f32
    %20 = vector.broadcast %cst_8 : f32 to vector<16x1xf32>
    %21 = arith.cmpf ole, %14, %20 : vector<16x1xf32>
    %22 = arith.andi %19, %21 : vector<16x1xi1>
    %cst_9 = arith.constant 1.000000e+00 : f32
    %23 = vector.broadcast %cst_9 : f32 to vector<16x1xf32>
    %24 = arith.select %22, %14, %23 : vector<16x1xi1>, vector<16x1xf32>
    %cst_10 = arith.constant 5.000000e-01 : f32
    %25 = vector.broadcast %cst_10 : f32 to vector<16x1xf32>
    %26 = arith.mulf %25, %24 : vector<16x1xf32>
    %27 = math.cos %26 : vector<16x1xf32>
    %28 = math.sin %26 : vector<16x1xf32>
    %29 = arith.mulf %14, %14 : vector<16x1xf32>
    %cst_11 = arith.constant 1.000000e+00 : f32
    %30 = vector.broadcast %cst_11 : f32 to vector<16x1xf32>
    %31 = arith.subf %30, %29 : vector<16x1xf32>
    %cst_12 = arith.constant 0.000000e+00 : f32
    %32 = vector.broadcast %cst_12 : f32 to vector<16x1xf32>
    %33 = arith.maximumf %31, %32 : vector<16x1xf32>
    %34 = math.sqrt %33 : vector<16x1xf32>
    %35 = arith.mulf %14, %27 : vector<16x1xf32>
    %36 = arith.mulf %34, %28 : vector<16x1xf32>
    %37 = arith.subf %35, %36 : vector<16x1xf32>
    %cst_13 = arith.constant 0.000000e+00 : f32
    %38 = vector.broadcast %cst_13 : f32 to vector<16x1xf32>
    %39 = arith.subf %38, %27 : vector<16x1xf32>
    %40 = arith.cmpf ogt, %14, %39 : vector<16x1xf32>
    %41 = arith.mulf %28, %26 : vector<16x1xf32>
    %42 = arith.subf %14, %41 : vector<16x1xf32>
    %43 = arith.select %40, %37, %42 : vector<16x1xi1>, vector<16x1xf32>
    %cst_14 = arith.constant 6.400000e+01 : f32
    %44 = vector.broadcast %cst_14 : f32 to vector<16x512xf32>
    %45 = arith.mulf %44, %2 : vector<16x512xf32>
    %46 = arith.subf %43, %14 : vector<16x1xf32>
    %cst_15 = arith.constant 6.400000e+01 : f32
    %47 = vector.broadcast %cst_15 : f32 to vector<16x1xf32>
    %48 = arith.mulf %47, %46 : vector<16x1xf32>
    %49 = vector.broadcast %48 : vector<16x1xf32> to vector<16x512xf32>
    %50 = arith.mulf %11, %49 : vector<16x512xf32>
    %51 = arith.addf %45, %50 : vector<16x512xf32>
    %c0_16 = arith.constant 0 : index
    %c0_17 = arith.constant 0 : index
    %52 = vector.load %arg5[%c0_16, %c0_17] : memref<16x512xf32, #tpu.memory_space<vmem>>, vector<16x512xf32>
    tpu.vector_store %arg5[%c0_16, %c0_17], %51 {strides = array<i32>} : memref<16x512xf32, #tpu.memory_space<vmem>>, vector<16x512xf32>,
    return
  }
  func.func @transform_0(%arg0: i32, %arg1: i32) -> (i32, i32) {
    %c0_i32 = arith.constant 0 : i32
    %c0_i32_0 = arith.constant 0 : i32
    return %arg0, %c0_i32 : i32, i32
  }
  func.func @transform_1(%arg0: i32, %arg1: i32) -> (i32, i32) {
    %c0_i32 = arith.constant 0 : i32
    %c0_i32_0 = arith.constant 0 : i32
    return %arg0, %c0_i32 : i32, i32
  }
  func.func @transform_2(%arg0: i32, %arg1: i32) -> (i32, i32) {
    %c0_i32 = arith.constant 0 : i32
    %c0_i32_0 = arith.constant 0 : i32
    return %c0_i32, %arg1 : i32, i32
  }
  func.func @transform_3(%arg0: i32, %arg1: i32) -> (i32, i32) {
    %c0_i32 = arith.constant 0 : i32
    return %arg0, %arg1 : i32, i32
  }
}

</mosaic_0001>

<llo_original>
// kernel: tpu_custom_call.1
$region0: #{tpu_custom_call.1}
  #allocation0 [shape = 'u32[]', space=smem, size = 0x4, offset = 0x4, fixed_abs, tag = 'smem constant byte address 0x4 - core index']
  #allocation1 [shape = 'u32[144,128]{1,0:T(1,128)}', space=vmem, size = 0x12000, scoped, tag = 'internal scratch']
  %s0 = inlined_call_operand.vmem [shape: s32[16,1], index: 0, kind: input, shape index: {}]
  %s1 = inlined_call_operand.vmem [shape: f32[16,64], index: 1, kind: input, shape index: {}]
  %s2 = inlined_call_operand.hbm [shape: f32[64,512], index: 2, kind: input, shape index: {}]
  %s3 = inlined_call_operand.hbm [shape: f32[16,512], index: 3, kind: output, shape index: {}]
  %s4 = sld [smem:[#allocation0]]
  $region26: #{tpu_custom_call.1} parent=0
    _
  %s6 = ssub.s32 1, %s4
  %s7 = scalar_select 0, %s6, %s4
  $region1: #{tpu_custom_call.1} parent=0
    #allocation2 [shape = 'u8[131072]{0}', space=vmem, size = 0x20000, scoped, tag = 'input window, operand 2, single buffered']
    #allocation3 [shape = 's32[1]{0}', space=sflag, size = 0x4, scoped, tag = 'scoped memory for tpu_custom_call.1']
    #allocation4 [shape = 's32[1]{0}', space=sflag, size = 0x4, scoped, tag = 'scoped memory for tpu_custom_call.1']
    #allocation5 [shape = 'u8[32768]{0}', space=vmem, size = 0x8000, scoped, tag = 'output window, operand 0, single buffered']
    %8 = vsyncpa [#allocation3], 0
    %9 = vsyncpa [#allocation4], 0
    // Predicated region
    $region2: #{tpu_custom_call.1} parent=1 // pred_check
      _
    $region3: #{tpu_custom_call.1} parent=1 // pred_check_branch
      %11 = sbr.rel (0) target = $region5
    $region4: #{tpu_custom_call.1} parent=1 // pred_region
      _
    $region5: #{tpu_custom_call.1} parent=1 // pred_fallthru
      _
    // Predicated region
    $region6: #{tpu_custom_call.1} parent=1 // pred_check
      _
    $region7: #{tpu_custom_call.1} parent=1 // pred_check_branch
      %13 = sbr.rel (0) target = $region9
    $region8: #{tpu_custom_call.1} parent=1 // pred_region
      _
    $region9: #{tpu_custom_call.1} parent=1 // pred_fallthru
      _
    // Predicated region
    $region10: #{tpu_custom_call.1} parent=1 // pred_check
      _
    $region11: #{tpu_custom_call.1} parent=1 // pred_check_branch
      %15 = sbr.rel (0) target = $region13
    $region12: #{tpu_custom_call.1} parent=1 // pred_region
      %s17 = ssub.s32 4096, 4096
      %18 = vsyncadd [#allocation3], %s17
      %s19 = sshll.u32 [#allocation2], 4
      %s20 = int_to_ptr.vmem [resolvable:$true] %s19
      %25 = dma.hbm_to_vmem [thread:$0]  %s2, 4096, %s20, [#allocation3], 512, 512, 32
    $region13: #{tpu_custom_call.1} parent=1 // pred_fallthru
      _
    // Predicated region
    $region14: #{tpu_custom_call.1} parent=1 // pred_check
      _
    $region15: #{tpu_custom_call.1} parent=1 // pred_check_branch
      %27 = sbr.rel (0) target = $region17
    $region16: #{tpu_custom_call.1} parent=1 // pred_region
      %28 = dma.done [#allocation3], 4096
    $region17: #{tpu_custom_call.1} parent=1 // pred_fallthru
      _
    %v29 = vld [vmem:[%s1] sm:$0xff]
    %v30 = vld [vmem:[%s1 + $0x8] sm:$0xff]
    %v31 = vld [vmem:[#allocation2] sm:$0xff]
    %v32 = vld [vmem:[#allocation2 + $0x8] sm:$0xff]
    %v33 = vld [vmem:[#allocation2 + $0x10] sm:$0xff]
    %v34 = vld [vmem:[#allocation2 + $0x18] sm:$0xff]
    %v35 = vld [vmem:[#allocation2 + $0x20] sm:$0xff]
    %v36 = vld [vmem:[#allocation2 + $0x28] sm:$0xff]
    %v37 = vld [vmem:[#allocation2 + $0x30] sm:$0xff]
    %v38 = vld [vmem:[#allocation2 + $0x38] sm:$0xff]
    %v39 = vld [vmem:[#allocation2 + $0x40] sm:$0xff]
    %v40 = vld [vmem:[#allocation2 + $0x48] sm:$0xff]
    %v41 = vld [vmem:[#allocation2 + $0x50] sm:$0xff]
    %v42 = vld [vmem:[#allocation2 + $0x58] sm:$0xff]
    %v43 = vld [vmem:[#allocation2 + $0x60] sm:$0xff]
    %v44 = vld [vmem:[#allocation2 + $0x68] sm:$0xff]
    %v45 = vld [vmem:[#allocation2 + $0x70] sm:$0xff]
    %v46 = vld [vmem:[#allocation2 + $0x78] sm:$0xff]
    %v47 = vld [vmem:[#allocation2 + $0x80] sm:$0xff]
    %v48 = vld [vmem:[#allocation2 + $0x88] sm:$0xff]
    %v49 = vld [vmem:[#allocation2 + $0x90] sm:$0xff]
    %v50 = vld [vmem:[#allocation2 + $0x98] sm:$0xff]
    %v51 = vld [vmem:[#allocation2 + $0xa0] sm:$0xff]
    %v52 = vld [vmem:[#allocation2 + $0xa8] sm:$0xff]
    %v53 = vld [vmem:[#allocation2 + $0xb0] sm:$0xff]
    %v54 = vld [vmem:[#allocation2 + $0xb8] sm:$0xff]
    %v55 = vld [vmem:[#allocation2 + $0xc0] sm:$0xff]
    %v56 = vld [vmem:[#allocation2 + $0xc8] sm:$0xff]
    %v57 = vld [vmem:[#allocation2 + $0xd0] sm:$0xff]
    %v58 = vld [vmem:[#allocation2 + $0xd8] sm:$0xff]
    %v59 = vld [vmem:[#allocation2 + $0xe0] sm:$0xff]
    %v60 = vld [vmem:[#allocation2 + $0xe8] sm:$0xff]
    %v61 = vld [vmem:[#allocation2 + $0xf0] sm:$0xff]
    %v62 = vld [vmem:[#allocation2 + $0xf8] sm:$0xff]
    %vm63 = vcmask 523264
    %v65 = vsel %vm63, %v29, 0
    %v68 = vsel %vm63, %v30, 0
    %70 = vmatprep.subr.mxu0 %v32
    %71 = vmatpush1.msra.mxu0 %v31
    %72 = vmatprep.subr.mxu0 %v36
    %73 = vmatpush1.msra.mxu0 %v35
    %74 = vmatprep.subr.mxu0 %v40
    %75 = vmatpush1.msra.mxu0 %v39
    %76 = vmatprep.subr.mxu0 %v44
    %77 = vmatpush1.msra.mxu0 %v43
    %78 = vmatprep.subr.mxu0 %v48
    %79 = vmatpush1.msra.mxu0 %v47
    %80 = vmatprep.subr.mxu0 %v52
    %81 = vmatpush1.msra.mxu0 %v51
    %82 = vmatprep.subr.mxu0 %v56
    %83 = vmatpush1.msra.mxu0 %v55
    %84 = vmatprep.subr.mxu0 %v60
    %85 = vmatpush1.msra.mxu0 %v59
    %86 = vmatprep.subr.mxu0 0.0
    %87 = vmatpush1.msra.mxu0 0.0
    %88 = vmatprep.subr.mxu0 0.0
    %89 = vmatpush1.msra.mxu0 0.0
    %90 = vmatprep.subr.mxu0 0.0
    %91 = vmatpush1.msra.mxu0 0.0
    %92 = vmatprep.subr.mxu0 0.0
    %93 = vmatpush1.msra.mxu0 0.0
    %94 = vmatprep.subr.mxu0 0.0
    %95 = vmatpush1.msra.mxu0 0.0
    %96 = vmatprep.subr.mxu0 0.0
    %97 = vmatpush1.msra.mxu0 0.0
    %98 = vmatprep.subr.mxu0 0.0
    %99 = vmatpush1.msra.mxu0 0.0
    %100 = vmatprep.subr.mxu0 0.0
    %101 = vmatpush1.msra.mxu0 0.0
    %102 = vmatprep.subr.mxu0 0.0
    %103 = vmatpush1.msra.mxu0 0.0
    %104 = vmatprep.subr.mxu0 0.0
    %105 = vmatpush1.msra.mxu0 0.0
    %106 = vmatprep.subr.mxu0 0.0
    %107 = vmatpush1.msra.mxu0 0.0
    %108 = vmatprep.subr.mxu0 0.0
    %109 = vmatpush1.msra.mxu0 0.0
    %110 = vmatprep.subr.mxu0 0.0
    %111 = vmatpush1.msra.mxu0 0.0
    %112 = vmatprep.subr.mxu0 0.0
    %113 = vmatpush1.msra.mxu0 0.0
    %114 = vmatprep.subr.mxu0 0.0
    %115 = vmatpush1.msra.mxu0 0.0
    %116 = vmatprep.subr.mxu0 0.0
    %117 = vmatpush1.msra.mxu0 0.0
    %118 = vmatprep.subr.mxu0 0.0
    %119 = vmatpush1.msra.mxu0 0.0
    %120 = vmatprep.subr.mxu0 0.0
    %121 = vmatpush1.msra.mxu0 0.0
    %122 = vmatprep.subr.mxu0 0.0
    %123 = vmatpush1.msra.mxu0 0.0
    %124 = vmatprep.subr.mxu0 0.0
    %125 = vmatpush1.msra.mxu0 0.0
    %126 = vmatprep.subr.mxu0 0.0
    %127 = vmatpush1.msra.mxu0 0.0
    %128 = vmatprep.subr.mxu0 0.0
    %129 = vmatpush1.msra.mxu0 0.0
    %130 = vmatprep.subr.mxu0 0.0
    %131 = vmatpush1.msra.mxu0 0.0
    %132 = vmatprep.subr.mxu0 0.0
    %133 = vmatpush1.msra.mxu0 0.0
    %134 = vmatprep.mubr.f32.mxu0 0.0
    %135 = vmatmul.mubr.f32.gmra.mrb[0].mxu0 %v65
    %v136 = vpop.f32.mrb[0].mxu0
    %v137 = vadd.f32 0.0, %v136
    %v138 = vpop.f32.mrb[0].mxu0
    %v139 = vadd.f32 0.0, %v138
    %140 = vmatprep.mubr.f32.mxu0 0.0
    %141 = vmatmul.mubr.f32.gmra.mrb[0].mxu0 %v68
    %v142 = vpop.f32.mrb[0].mxu0
    %v143 = vadd.f32 0.0, %v142
    %v144 = vpop.f32.mrb[0].mxu0
    %v145 = vadd.f32 0.0, %v144
    %146 = vdwg.mxu0
    %147 = vmatprep.subr.mxu0 %v34
    %148 = vmatpush1.msra.mxu0 %v33
    %149 = vmatprep.subr.mxu0 %v38
    %150 = vmatpush1.msra.mxu0 %v37
    %151 = vmatprep.subr.mxu0 %v42
    %152 = vmatpush1.msra.mxu0 %v41
    %153 = vmatprep.subr.mxu0 %v46
    %154 = vmatpush1.msra.mxu0 %v45
    %155 = vmatprep.subr.mxu0 %v50
    %156 = vmatpush1.msra.mxu0 %v49
    %157 = vmatprep.subr.mxu0 %v54
    %158 = vmatpush1.msra.mxu0 %v53
    %159 = vmatprep.subr.mxu0 %v58
    %160 = vmatpush1.msra.mxu0 %v57
    %161 = vmatprep.subr.mxu0 %v62
    %162 = vmatpush1.msra.mxu0 %v61
    %163 = vmatprep.subr.mxu0 0.0
    %164 = vmatpush1.msra.mxu0 0.0
    %165 = vmatprep.subr.mxu0 0.0
    %166 = vmatpush1.msra.mxu0 0.0
    %167 = vmatprep.subr.mxu0 0.0
    %168 = vmatpush1.msra.mxu0 0.0
    %169 = vmatprep.subr.mxu0 0.0
    %170 = vmatpush1.msra.mxu0 0.0
    %171 = vmatprep.subr.mxu0 0.0
    %172 = vmatpush1.msra.mxu0 0.0
    %173 = vmatprep.subr.mxu0 0.0
    %174 = vmatpush1.msra.mxu0 0.0
    %175 = vmatprep.subr.mxu0 0.0
    %176 = vmatpush1.msra.mxu0 0.0
    %177 = vmatprep.subr.mxu0 0.0
    %178 = vmatpush1.msra.mxu0 0.0
    %179 = vmatprep.subr.mxu0 0.0
    %180 = vmatpush1.msra.mxu0 0.0
    %181 = vmatprep.subr.mxu0 0.0
    %182 = vmatpush1.msra.mxu0 0.0
    %183 = vmatprep.subr.mxu0 0.0
    %184 = vmatpush1.msra.mxu0 0.0
    %185 = vmatprep.subr.mxu0 0.0
    %186 = vmatpush1.msra.mxu0 0.0
    %187 = vmatprep.subr.mxu0 0.0
    %188 = vmatpush1.msra.mxu0 0.0
    %189 = vmatprep.subr.mxu0 0.0
    %190 = vmatpush1.msra.mxu0 0.0
    %191 = vmatprep.subr.mxu0 0.0
    %192 = vmatpush1.msra.mxu0 0.0
    %193 = vmatprep.subr.mxu0 0.0
    %194 = vmatpush1.msra.mxu0 0.0
    %195 = vmatprep.subr.mxu0 0.0
    %196 = vmatpush1.msra.mxu0 0.0
    %197 = vmatprep.subr.mxu0 0.0
    %198 = vmatpush1.msra.mxu0 0.0
    %199 = vmatprep.subr.mxu0 0.0
    %200 = vmatpush1.msra.mxu0 0.0
    %201 = vmatprep.subr.mxu0 0.0
    %202 = vmatpush1.msra.mxu0 0.0
    %203 = vmatprep.subr.mxu0 0.0
    %204 = vmatpush1.msra.mxu0 0.0
    %205 = vmatprep.subr.mxu0 0.0
    %206 = vmatpush1.msra.mxu0 0.0
    %207 = vmatprep.subr.mxu0 0.0
    %208 = vmatpush1.msra.mxu0 0.0
    %209 = vmatprep.subr.mxu0 0.0
    %210 = vmatpush1.msra.mxu0 0.0
    %211 = vmatprep.mubr.f32.mxu0 0.0
    %212 = vmatmul.mubr.f32.gmra.mrb[0].mxu0 %v65
    %v213 = vpop.f32.mrb[0].mxu0
    %v214 = vadd.f32 0.0, %v213
    %v215 = vpop.f32.mrb[0].mxu0
    %v216 = vadd.f32 0.0, %v215
    %217 = vmatprep.mubr.f32.mxu0 0.0
    %218 = vmatmul.mubr.f32.gmra.mrb[0].mxu0 %v68
    %v219 = vpop.f32.mrb[0].mxu0
    %v220 = vadd.f32 0.0, %v219
    %v221 = vpop.f32.mrb[0].mxu0
    %v222 = vadd.f32 0.0, %v221
    %223 = vdwg.mxu0
    %s224 = smul.u32 0, 512
    %v225 = vlaneseq
    %v226 = vand.u32 %v225, 127
    %v227 = vadd.s32 %v226, 128
    %v228 = vadd.s32 %v226, 256
    %v229 = vadd.s32 %v226, 384
    %v230 = vstv %s224
    %v231 = vadd.s32 %v230, %v226
    %v232 = vadd.s32 %v230, %v227
    %v233 = vadd.s32 %v230, %v228
    %v234 = vadd.s32 %v230, %v229
    %v235 = vld [vmem:[%s0] sm:$0xff]
    %v236 = vld [vmem:[%s0 + $0x8] sm:$0xff]
    %237 = vset.pattern.permute.xlu0 0
    %238 = vperm.xlu0 %237, %v235
    %v239 = vpop.permute.xlu0 %238
    %240 = vset.pattern.permute.xlu0 0
    %241 = vperm.xlu0 %240, %v236
    %v242 = vpop.permute.xlu0 %241
    %vm243 = vcmp.eq.s32.totalorder %v231, %v239
    %vm244 = vcmp.eq.s32.totalorder %v232, %v239
    %vm245 = vcmp.eq.s32.totalorder %v233, %v239
    %vm246 = vcmp.eq.s32.totalorder %v234, %v239
    %vm247 = vcmp.eq.s32.totalorder %v231, %v242
    %vm248 = vcmp.eq.s32.totalorder %v232, %v242
    %vm249 = vcmp.eq.s32.totalorder %v233, %v242
    %vm250 = vcmp.eq.s32.totalorder %v234, %v242
    %v251 = vsel %vm243, 1, 0
    %v252 = vsel %vm244, 1, 0
    %v253 = vsel %vm245, 1, 0
    %v254 = vsel %vm246, 1, 0
    %v255 = vsel %vm247, 1, 0
    %v256 = vsel %vm248, 1, 0
    %v257 = vsel %vm249, 1, 0
    %v258 = vsel %vm250, 1, 0
    %v259 = vcvt.s32.f32 %v251
    %v260 = vcvt.s32.f32 %v252
    %v261 = vcvt.s32.f32 %v253
    %v262 = vcvt.s32.f32 %v254
    %v263 = vcvt.s32.f32 %v255
    %v264 = vcvt.s32.f32 %v256
    %v265 = vcvt.s32.f32 %v257
    %v266 = vcvt.s32.f32 %v258
    %v267 = vmul.f32 %v259, %v137
    %v268 = vmul.f32 %v260, %v139
    %v269 = vmul.f32 %v261, %v214
    %v270 = vmul.f32 %v262, %v216
    %v271 = vmul.f32 %v263, %v143
    %v272 = vmul.f32 %v264, %v145
    %v273 = vmul.f32 %v265, %v220
    %v274 = vmul.f32 %v266, %v222
    %v275 = vadd.f32 %v267, %v268
    %v276 = vadd.f32 %v275, %v269
    %v277 = vadd.f32 %v276, %v270
    %278 = vadd.xlane.f32.xlu0 %v277
    %v279 = vpop.xlane.xlu0 %278
    %v280 = vadd.f32 %v271, %v272
    %v281 = vadd.f32 %v280, %v273
    %v282 = vadd.f32 %v281, %v274
    %283 = vadd.xlane.f32.xlu0 %v282
    %v284 = vpop.xlane.xlu0 %283
    %vm285 = vcmp.gt.f32.partialorder %v279, 0.0
    %vm286 = vcmp.gt.f32.partialorder %v284, 0.0
    %vm287 = vcmp.ge.f32.partialorder %v279, 0.5
    %vm288 = vcmp.ge.f32.partialorder %v284, 0.5
    %vm289 = vmand %vm285, %vm287
    %vm290 = vmand %vm286, %vm288
    %vm291 = vcmp.le.f32.partialorder %v279, 1.0
    %vm292 = vcmp.le.f32.partialorder %v284, 1.0
    %vm293 = vmand %vm289, %vm291
    %vm294 = vmand %vm290, %vm292
    %v295 = vsel %vm293, %v279, 1.0
    %v296 = vsel %vm294, %v284, 1.0
    %v297 = vmul.f32 %v295, 0.5
    %v298 = vmul.f32 %v296, 0.5
    %v299 = vand.u32 2147483647, %v297
    %vm300 = vcmp.le.f32.partialorder %v299, 0.7853982
    %vm301 = vcmp.lt.s32.totalorder %v297, 0
    %v302 = vand.u32 %v297, 2139095040
    %v303 = vshrl.u32 %v302, 23
    %v304 = vsub.s32 %v303, 127
    %v305 = vand.u32 2147483647, %v297
    %v306 = vand.u32 %v305, 8388607
    %v307 = vor.u32 %v306, 8388608
    %v308 = vsub.s32 0, %v307
    %v309 = vadd.s32 %v304, 1
    %vm310 = vcmp.gt.s32.totalorder %v309, 0
    %v311 = vsel %vm310, %v309, 0
    %v312 = vshrl.u32 %v311, 5
    %v313 = vand.u32 %v311, 31
    %v314 = vsub.s32 32, %v313
    %v315 = vshrl.u32 683565275, %v314
    %v316 = vshll.u32 683565275, %v313
    %v317 = vshrl.u32 2475754826, %v314
    %v318 = vor.u32 %v316, %v317
    %v319 = vshll.u32 2475754826, %v313
    %v320 = vshrl.u32 2131351028, %v314
    %v321 = vor.u32 %v319, %v320
    %v322 = vshll.u32 2131351028, %v313
    %v323 = vshrl.u32 2102212464, %v314
    %v324 = vor.u32 %v322, %v323
    %v325 = vshll.u32 2102212464, %v313
    %v326 = vshrl.u32 920167782, %v314
    %v327 = vor.u32 %v325, %v326
    %v328 = vshll.u32 920167782, %v313
    %v329 = vshrl.u32 1326507024, %v314
    %v330 = vor.u32 %v328, %v329
    %vm331 = vcmp.lt.s32.totalorder %v312, 1
    %vm332 = vcmp.lt.s32.totalorder %v312, 2
    %vm333 = vcmp.lt.s32.totalorder %v312, 3
    %vm334 = vcmp.lt.s32.totalorder %v312, 4
    %v335 = vsel %vm331, %v315, %v318
    %v336 = vsel %vm334, %v324, 2102212464
    %v337 = vsel %vm333, %v321, %v336
    %v338 = vsel %vm332, %v335, %v337
    %v339 = vsel %vm331, %v318, %v321
    %v340 = vsel %vm334, %v327, 920167782
    %v341 = vsel %vm333, %v324, %v340
    %v342 = vsel %vm332, %v339, %v341
    %v343 = vsel %vm331, %v321, %v324
    %v344 = vsel %vm334, %v330, 1326507024
    %v345 = vsel %vm333, %v327, %v344
    %v346 = vsel %vm332, %v343, %v345
    %v347 = vshll.u32 %v307, 8
    %v348 = vmul.u32.u64.compose %v347, %v346
    %v349 = vextract.low.u32 %v348
    %v350 = vextract.high.u32 %v348
    %v351 = vmul.u32.u64.compose %v347, %v342
    %v352 = vextract.low.u32 %v351
    %v353 = vextract.high.u32 %v351
    %v354 = vmul.u32 %v347, %v338
    %v355 = vadd.s32 %v350, %v352
    %vm356 = vc.u32 %v350, %v352
    %v357 = vadd.s32 %v353, 1
    %v358 = vsel %vm356, %v357, %v353
    %v359 = vadd.s32 %v354, %v358
    %v360 = vadd.s32 %v359, 536870912
    %v361 = vshrl.u32 %v360, 30
    %v362 = vshll.u32 %v361, 30
    %v363 = vsub.s32 %v359, %v362
    %vm364 = vcmp.lt.s32.totalorder %v363, 0
    %v365 = vsub.s32 0, %v363
    %v366 = vsel %vm364, %v365, %v363
    %v367 = vclz %v366
    %v368 = vsub.s32 %v367, 2
    %vm369 = vcmp.gt.s32.totalorder 0, %v368
    %v370 = vsel %vm369, 0, %v368
    %v371 = vsub.s32 32, %v370
    %v372 = vshll.u32 %v363, %v370
    %v373 = vshrl.u32 %v355, %v371
    %v374 = vor.u32 %v372, %v373
    %v375 = vsub.s32 4294967266, %v370
    %v376 = vadd.s32 %v375, 127
    %v377 = vshll.u32 %v376, 23
    %v378 = vor.u32 4788187, %v377
    %v379 = vand.u32 2147483647, %v378
    %v381 = vcvt.s32.f32 %v374
    %v382 = vmul.f32 %v381, %v379
    %v383 = vxor.u32 %v382, 2147483648
    %v384 = vsel %vm301, %v383, %v382
    %v385 = vsub.s32 4, %v361
    %v386 = vsel %vm301, %v385, %v361
    %v387 = vsel %vm300, %v297, %v384
    %v388 = vsel %vm300, 0, %v386
    %v389 = vcosq.f32.pop %v387
    %v390 = vsinq.f32.pop %v387
    %vm391 = vweird.f32 %v297
    %v392 = vand.u32 %v388, 3
    %vm393 = vcmp.lt.s32.totalorder %v392, 2
    %vm394 = vcmp.eq.s32.totalorder %v392, 0
    %v395 = vxor.u32 %v390, 2147483648
    %v396 = vsel %vm394, %v389, %v395
    %vm397 = vcmp.eq.s32.totalorder %v392, 2
    %v398 = vxor.u32 %v389, 2147483648
    %v399 = vsel %vm397, %v398, %v390
    %v400 = vsel %vm393, %v396, %v399
    %v401 = vsel %vm391, nan, %v400
    %v402 = vand.u32 2147483647, %v298
    %vm403 = vcmp.le.f32.partialorder %v402, 0.7853982
    %vm404 = vcmp.lt.s32.totalorder %v298, 0
    %v405 = vand.u32 %v298, 2139095040
    %v406 = vshrl.u32 %v405, 23
    %v407 = vsub.s32 %v406, 127
    %v408 = vand.u32 2147483647, %v298
    %v409 = vand.u32 %v408, 8388607
    %v410 = vor.u32 %v409, 8388608
    %v411 = vsub.s32 0, %v410
    %v412 = vadd.s32 %v407, 1
    %vm413 = vcmp.gt.s32.totalorder %v412, 0
    %v414 = vsel %vm413, %v412, 0
    %v415 = vshrl.u32 %v414, 5
    %v416 = vand.u32 %v414, 31
    %v417 = vsub.s32 32, %v416
    %v418 = vshrl.u32 683565275, %v417
    %v419 = vshll.u32 683565275, %v416
    %v420 = vshrl.u32 2475754826, %v417
    %v421 = vor.u32 %v419, %v420
    %v422 = vshll.u32 2475754826, %v416
    %v423 = vshrl.u32 2131351028, %v417
    %v424 = vor.u32 %v422, %v423
    %v425 = vshll.u32 2131351028, %v416
    %v426 = vshrl.u32 2102212464, %v417
    %v427 = vor.u32 %v425, %v426
    %v428 = vshll.u32 2102212464, %v416
    %v429 = vshrl.u32 920167782, %v417
    %v430 = vor.u32 %v428, %v429
    %v431 = vshll.u32 920167782, %v416
    %v432 = vshrl.u32 1326507024, %v417
    %v433 = vor.u32 %v431, %v432
    %vm434 = vcmp.lt.s32.totalorder %v415, 1
    %vm435 = vcmp.lt.s32.totalorder %v415, 2
    %vm436 = vcmp.lt.s32.totalorder %v415, 3
    %vm437 = vcmp.lt.s32.totalorder %v415, 4
    %v438 = vsel %vm434, %v418, %v421
    %v439 = vsel %vm437, %v427, 2102212464
    %v440 = vsel %vm436, %v424, %v439
    %v441 = vsel %vm435, %v438, %v440
    %v442 = vsel %vm434, %v421, %v424
    %v443 = vsel %vm437, %v430, 920167782
    %v444 = vsel %vm436, %v427, %v443
    %v445 = vsel %vm435, %v442, %v444
    %v446 = vsel %vm434, %v424, %v427
    %v447 = vsel %vm437, %v433, 1326507024
    %v448 = vsel %vm436, %v430, %v447
    %v449 = vsel %vm435, %v446, %v448
    %v450 = vshll.u32 %v410, 8
    %v451 = vmul.u32.u64.compose %v450, %v449
    %v452 = vextract.low.u32 %v451
    %v453 = vextract.high.u32 %v451
    %v454 = vmul.u32.u64.compose %v450, %v445
    %v455 = vextract.low.u32 %v454
    %v456 = vextract.high.u32 %v454
    %v457 = vmul.u32 %v450, %v441
    %v458 = vadd.s32 %v453, %v455
    %vm459 = vc.u32 %v453, %v455
    %v460 = vadd.s32 %v456, 1
    %v461 = vsel %vm459, %v460, %v456
    %v462 = vadd.s32 %v457, %v461
    %v463 = vadd.s32 %v462, 536870912
    %v464 = vshrl.u32 %v463, 30
    %v465 = vshll.u32 %v464, 30
    %v466 = vsub.s32 %v462, %v465
    %vm467 = vcmp.lt.s32.totalorder %v466, 0
    %v468 = vsub.s32 0, %v466
    %v469 = vsel %vm467, %v468, %v466
    %v470 = vclz %v469
    %v471 = vsub.s32 %v470, 2
    %vm472 = vcmp.gt.s32.totalorder 0, %v471
    %v473 = vsel %vm472, 0, %v471
    %v474 = vsub.s32 32, %v473
    %v475 = vshll.u32 %v466, %v473
    %v476 = vshrl.u32 %v458, %v474
    %v477 = vor.u32 %v475, %v476
    %v478 = vsub.s32 4294967266, %v473
    %v479 = vadd.s32 %v478, 127
    %v480 = vshll.u32 %v479, 23
    %v481 = vor.u32 4788187, %v480
    %v482 = vand.u32 2147483647, %v481
    %v484 = vcvt.s32.f32 %v477
    %v485 = vmul.f32 %v484, %v482
    %v486 = vxor.u32 %v485, 2147483648
    %v487 = vsel %vm404, %v486, %v485
    %v488 = vsub.s32 4, %v464
    %v489 = vsel %vm404, %v488, %v464
    %v490 = vsel %vm403, %v298, %v487
    %v491 = vsel %vm403, 0, %v489
    %v492 = vcosq.f32.pop %v490
    %v493 = vsinq.f32.pop %v490
    %vm494 = vweird.f32 %v298
    %v495 = vand.u32 %v491, 3
    %vm496 = vcmp.lt.s32.totalorder %v495, 2
    %vm497 = vcmp.eq.s32.totalorder %v495, 0
    %v498 = vxor.u32 %v493, 2147483648
    %v499 = vsel %vm497, %v492, %v498
    %vm500 = vcmp.eq.s32.totalorder %v495, 2
    %v501 = vxor.u32 %v492, 2147483648
    %v502 = vsel %vm500, %v501, %v493
    %v503 = vsel %vm496, %v499, %v502
    %v504 = vsel %vm494, nan, %v503
    %v505 = vand.u32 2147483647, %v297
    %vm506 = vcmp.le.f32.partialorder %v505, 0.7853982
    %vm507 = vcmp.lt.s32.totalorder %v297, 0
    %v508 = vand.u32 %v297, 2139095040
    %v509 = vshrl.u32 %v508, 23
    %v510 = vsub.s32 %v509, 127
    %v511 = vand.u32 2147483647, %v297
    %v512 = vand.u32 %v511, 8388607
    %v513 = vor.u32 %v512, 8388608
    %v514 = vsub.s32 0, %v513
    %v515 = vadd.s32 %v510, 1
    %vm516 = vcmp.gt.s32.totalorder %v515, 0
    %v517 = vsel %vm516, %v515, 0
    %v518 = vshrl.u32 %v517, 5
    %v519 = vand.u32 %v517, 31
    %v520 = vsub.s32 32, %v519
    %v521 = vshrl.u32 683565275, %v520
    %v522 = vshll.u32 683565275, %v519
    %v523 = vshrl.u32 2475754826, %v520
    %v524 = vor.u32 %v522, %v523
    %v525 = vshll.u32 2475754826, %v519
    %v526 = vshrl.u32 2131351028, %v520
    %v527 = vor.u32 %v525, %v526
    %v528 = vshll.u32 2131351028, %v519
    %v529 = vshrl.u32 2102212464, %v520
    %v530 = vor.u32 %v528, %v529
    %v531 = vshll.u32 2102212464, %v519
    %v532 = vshrl.u32 920167782, %v520
    %v533 = vor.u32 %v531, %v532
    %v534 = vshll.u32 920167782, %v519
    %v535 = vshrl.u32 1326507024, %v520
    %v536 = vor.u32 %v534, %v535
    %vm537 = vcmp.lt.s32.totalorder %v518, 1
    %vm538 = vcmp.lt.s32.totalorder %v518, 2
    %vm539 = vcmp.lt.s32.totalorder %v518, 3
    %vm540 = vcmp.lt.s32.totalorder %v518, 4
    %v541 = vsel %vm537, %v521, %v524
    %v542 = vsel %vm540, %v530, 2102212464
    %v543 = vsel %vm539, %v527, %v542
    %v544 = vsel %vm538, %v541, %v543
    %v545 = vsel %vm537, %v524, %v527
    %v546 = vsel %vm540, %v533, 920167782
    %v547 = vsel %vm539, %v530, %v546
    %v548 = vsel %vm538, %v545, %v547
    %v549 = vsel %vm537, %v527, %v530
    %v550 = vsel %vm540, %v536, 1326507024
    %v551 = vsel %vm539, %v533, %v550
    %v552 = vsel %vm538, %v549, %v551
    %v553 = vshll.u32 %v513, 8
    %v554 = vmul.u32.u64.compose %v553, %v552
    %v555 = vextract.low.u32 %v554
    %v556 = vextract.high.u32 %v554
    %v557 = vmul.u32.u64.compose %v553, %v548
    %v558 = vextract.low.u32 %v557
    %v559 = vextract.high.u32 %v557
    %v560 = vmul.u32 %v553, %v544
    %v561 = vadd.s32 %v556, %v558
    %vm562 = vc.u32 %v556, %v558
    %v563 = vadd.s32 %v559, 1
    %v564 = vsel %vm562, %v563, %v559
    %v565 = vadd.s32 %v560, %v564
    %v566 = vadd.s32 %v565, 536870912
    %v567 = vshrl.u32 %v566, 30
    %v568 = vshll.u32 %v567, 30
    %v569 = vsub.s32 %v565, %v568
    %vm570 = vcmp.lt.s32.totalorder %v569, 0
    %v571 = vsub.s32 0, %v569
    %v572 = vsel %vm570, %v571, %v569
    %v573 = vclz %v572
    %v574 = vsub.s32 %v573, 2
    %vm575 = vcmp.gt.s32.totalorder 0, %v574
    %v576 = vsel %vm575, 0, %v574
    %v577 = vsub.s32 32, %v576
    %v578 = vshll.u32 %v569, %v576
    %v579 = vshrl.u32 %v561, %v577
    %v580 = vor.u32 %v578, %v579
    %v581 = vsub.s32 4294967266, %v576
    %v582 = vadd.s32 %v581, 127
    %v583 = vshll.u32 %v582, 23
    %v584 = vor.u32 4788187, %v583
    %v585 = vand.u32 2147483647, %v584
    %v587 = vcvt.s32.f32 %v580
    %v588 = vmul.f32 %v587, %v585
    %v589 = vxor.u32 %v588, 2147483648
    %v590 = vsel %vm507, %v589, %v588
    %v591 = vsub.s32 4, %v567
    %v592 = vsel %vm507, %v591, %v567
    %v593 = vsel %vm506, %v297, %v590
    %v594 = vsel %vm506, 0, %v592
    %v595 = vcosq.f32.pop %v593
    %v596 = vsinq.f32.pop %v593
    %vm597 = vweird.f32 %v297
    %v598 = vadd.s32 %v594, 3
    %v599 = vand.u32 %v598, 3
    %vm600 = vcmp.lt.s32.totalorder %v599, 2
    %vm601 = vcmp.eq.s32.totalorder %v599, 0
    %v602 = vxor.u32 %v596, 2147483648
    %v603 = vsel %vm601, %v595, %v602
    %vm604 = vcmp.eq.s32.totalorder %v599, 2
    %v605 = vxor.u32 %v595, 2147483648
    %v606 = vsel %vm604, %v605, %v596
    %v607 = vsel %vm600, %v603, %v606
    %v608 = vsel %vm597, nan, %v607
    %v609 = vand.u32 2147483647, %v298
    %vm610 = vcmp.le.f32.partialorder %v609, 0.7853982
    %vm611 = vcmp.lt.s32.totalorder %v298, 0
    %v612 = vand.u32 %v298, 2139095040
    %v613 = vshrl.u32 %v612, 23
    %v614 = vsub.s32 %v613, 127
    %v615 = vand.u32 2147483647, %v298
    %v616 = vand.u32 %v615, 8388607
    %v617 = vor.u32 %v616, 8388608
    %v618 = vsub.s32 0, %v617
    %v619 = vadd.s32 %v614, 1
    %vm620 = vcmp.gt.s32.totalorder %v619, 0
    %v621 = vsel %vm620, %v619, 0
    %v622 = vshrl.u32 %v621, 5
    %v623 = vand.u32 %v621, 31
    %v624 = vsub.s32 32, %v623
    %v625 = vshrl.u32 683565275, %v624
    %v626 = vshll.u32 683565275, %v623
    %v627 = vshrl.u32 2475754826, %v624
    %v628 = vor.u32 %v626, %v627
    %v629 = vshll.u32 2475754826, %v623
    %v630 = vshrl.u32 2131351028, %v624
    %v631 = vor.u32 %v629, %v630
    %v632 = vshll.u32 2131351028, %v623
    %v633 = vshrl.u32 2102212464, %v624
    %v634 = vor.u32 %v632, %v633
    %v635 = vshll.u32 2102212464, %v623
    %v636 = vshrl.u32 920167782, %v624
    %v637 = vor.u32 %v635, %v636
    %v638 = vshll.u32 920167782, %v623
    %v639 = vshrl.u32 1326507024, %v624
    %v640 = vor.u32 %v638, %v639
    %vm641 = vcmp.lt.s32.totalorder %v622, 1
    %vm642 = vcmp.lt.s32.totalorder %v622, 2
    %vm643 = vcmp.lt.s32.totalorder %v622, 3
    %vm644 = vcmp.lt.s32.totalorder %v622, 4
    %v645 = vsel %vm641, %v625, %v628
    %v646 = vsel %vm644, %v634, 2102212464
    %v647 = vsel %vm643, %v631, %v646
    %v648 = vsel %vm642, %v645, %v647
    %v649 = vsel %vm641, %v628, %v631
    %v650 = vsel %vm644, %v637, 920167782
    %v651 = vsel %vm643, %v634, %v650
    %v652 = vsel %vm642, %v649, %v651
    %v653 = vsel %vm641, %v631, %v634
    %v654 = vsel %vm644, %v640, 1326507024
    %v655 = vsel %vm643, %v637, %v654
    %v656 = vsel %vm642, %v653, %v655
    %v657 = vshll.u32 %v617, 8
    %v658 = vmul.u32.u64.compose %v657, %v656
    %v659 = vextract.low.u32 %v658
    %v660 = vextract.high.u32 %v658
    %v661 = vmul.u32.u64.compose %v657, %v652
    %v662 = vextract.low.u32 %v661
    %v663 = vextract.high.u32 %v661
    %v664 = vmul.u32 %v657, %v648
    %v665 = vadd.s32 %v660, %v662
    %vm666 = vc.u32 %v660, %v662
    %v667 = vadd.s32 %v663, 1
    %v668 = vsel %vm666, %v667, %v663
    %v669 = vadd.s32 %v664, %v668
    %v670 = vadd.s32 %v669, 536870912
    %v671 = vshrl.u32 %v670, 30
    %v672 = vshll.u32 %v671, 30
    %v673 = vsub.s32 %v669, %v672
    %vm674 = vcmp.lt.s32.totalorder %v673, 0
    %v675 = vsub.s32 0, %v673
    %v676 = vsel %vm674, %v675, %v673
    %v677 = vclz %v676
    %v678 = vsub.s32 %v677, 2
    %vm679 = vcmp.gt.s32.totalorder 0, %v678
    %v680 = vsel %vm679, 0, %v678
    %v681 = vsub.s32 32, %v680
    %v682 = vshll.u32 %v673, %v680
    %v683 = vshrl.u32 %v665, %v681
    %v684 = vor.u32 %v682, %v683
    %v685 = vsub.s32 4294967266, %v680
    %v686 = vadd.s32 %v685, 127
    %v687 = vshll.u32 %v686, 23
    %v688 = vor.u32 4788187, %v687
    %v689 = vand.u32 2147483647, %v688
    %v691 = vcvt.s32.f32 %v684
    %v692 = vmul.f32 %v691, %v689
    %v693 = vxor.u32 %v692, 2147483648
    %v694 = vsel %vm611, %v693, %v692
    %v695 = vsub.s32 4, %v671
    %v696 = vsel %vm611, %v695, %v671
    %v697 = vsel %vm610, %v298, %v694
    %v698 = vsel %vm610, 0, %v696
    %v699 = vcosq.f32.pop %v697
    %v700 = vsinq.f32.pop %v697
    %vm701 = vweird.f32 %v298
    %v702 = vadd.s32 %v698, 3
    %v703 = vand.u32 %v702, 3
    %vm704 = vcmp.lt.s32.totalorder %v703, 2
    %vm705 = vcmp.eq.s32.totalorder %v703, 0
    %v706 = vxor.u32 %v700, 2147483648
    %v707 = vsel %vm705, %v699, %v706
    %vm708 = vcmp.eq.s32.totalorder %v703, 2
    %v709 = vxor.u32 %v699, 2147483648
    %v710 = vsel %vm708, %v709, %v700
    %v711 = vsel %vm704, %v707, %v710
    %v712 = vsel %vm701, nan, %v711
    %v713 = vmul.f32 %v279, %v279
    %v714 = vmul.f32 %v284, %v284
    %v715 = vsub.f32 1.0, %v713
    %v716 = vsub.f32 1.0, %v714
    %v717 = vmax.f32 %v715, 0.0
    %v718 = vmax.f32 %v716, 0.0
    %v719 = vrsqrt.pop %v717
    %v720 = vmul.f32 %v717, %v719
    %vm721 = vcmp.eq.f32.partialorder %v717, inf
    %v722 = vsel %vm721, %v717, %v720
    %vm723 = vcmp.eq.f32.partialorder %v717, 0.0
    %v724 = vand.u32 %v717, 2147483648
    %v725 = vsel %vm723, %v724, %v722
    %v726 = vrsqrt.pop %v718
    %v727 = vmul.f32 %v718, %v726
    %vm728 = vcmp.eq.f32.partialorder %v718, inf
    %v729 = vsel %vm728, %v718, %v727
    %vm730 = vcmp.eq.f32.partialorder %v718, 0.0
    %v731 = vand.u32 %v718, 2147483648
    %v732 = vsel %vm730, %v731, %v729
    %v733 = vmul.f32 %v279, %v401
    %v734 = vmul.f32 %v284, %v504
    %v735 = vmul.f32 %v725, %v608
    %v736 = vmul.f32 %v732, %v712
    %v737 = vsub.f32 %v733, %v735
    %v738 = vsub.f32 %v734, %v736
    %v739 = vsub.f32 0.0, %v401
    %v740 = vsub.f32 0.0, %v504
    %vm741 = vcmp.gt.f32.partialorder %v279, %v739
    %vm742 = vcmp.gt.f32.partialorder %v284, %v740
    %v743 = vmul.f32 %v608, %v297
    %v744 = vmul.f32 %v712, %v298
    %v745 = vsub.f32 %v279, %v743
    %v746 = vsub.f32 %v284, %v744
    %v747 = vsel %vm741, %v737, %v745
    %v748 = vsel %vm742, %v738, %v746
    %v749 = vmul.f32 %v137, 64.0
    %v750 = vmul.f32 %v139, 64.0
    %v751 = vmul.f32 %v214, 64.0
    %v752 = vmul.f32 %v216, 64.0
    %v753 = vmul.f32 %v143, 64.0
    %v754 = vmul.f32 %v145, 64.0
    %v755 = vmul.f32 %v220, 64.0
    %v756 = vmul.f32 %v222, 64.0
    %v757 = vsub.f32 %v747, %v279
    %v758 = vsub.f32 %v748, %v284
    %v759 = vmul.f32 %v757, 64.0
    %v760 = vmul.f32 %v758, 64.0
    %v761 = vmul.f32 %v259, %v759
    %v762 = vmul.f32 %v260, %v759
    %v763 = vmul.f32 %v261, %v759
    %v764 = vmul.f32 %v262, %v759
    %v765 = vmul.f32 %v263, %v760
    %v766 = vmul.f32 %v264, %v760
    %v767 = vmul.f32 %v265, %v760
    %v768 = vmul.f32 %v266, %v760
    %v769 = vadd.f32 %v749, %v761
    %v770 = vadd.f32 %v750, %v762
    %v771 = vadd.f32 %v751, %v763
    %v772 = vadd.f32 %v752, %v764
    %v773 = vadd.f32 %v753, %v765
    %v774 = vadd.f32 %v754, %v766
    %v775 = vadd.f32 %v755, %v767
    %v776 = vadd.f32 %v756, %v768
    %777 = vst [vmem:[#allocation5] sm:$0xff] %v769
    %778 = vst [vmem:[#allocation5 + $0x8] sm:$0xff] %v770
    %779 = vst [vmem:[#allocation5 + $0x10] sm:$0xff] %v771
    %780 = vst [vmem:[#allocation5 + $0x18] sm:$0xff] %v772
    %781 = vst [vmem:[#allocation5 + $0x20] sm:$0xff] %v773
    %782 = vst [vmem:[#allocation5 + $0x28] sm:$0xff] %v774
    %783 = vst [vmem:[#allocation5 + $0x30] sm:$0xff] %v775
    %784 = vst [vmem:[#allocation5 + $0x38] sm:$0xff] %v776
    // Predicated region
    $region18: #{tpu_custom_call.1} parent=1 // pred_check
      _
    $region19: #{tpu_custom_call.1} parent=1 // pred_check_branch
      %786 = sbr.rel (0) target = $region21
    $region20: #{tpu_custom_call.1} parent=1 // pred_region
      %s788 = ssub.s32 1024, 1024
      %789 = vsyncadd [#allocation4], %s788
      %s790 = sshll.u32 [#allocation5], 4
      %s791 = int_to_ptr.vmem [resolvable:$true] %s790
      %796 = dma.vmem_to_hbm [thread:$0]  %s791, 1024, %s3, [#allocation4], 512, 512, 32
    $region21: #{tpu_custom_call.1} parent=1 // pred_fallthru
      _
    // Predicated region
    $region22: #{tpu_custom_call.1} parent=1 // pred_check
      _
    $region23: #{tpu_custom_call.1} parent=1 // pred_check_branch
      %798 = sbr.rel (0) target = $region25
    $region24: #{tpu_custom_call.1} parent=1 // pred_region
      %799 = dma.done [#allocation4], 1024
    $region25: #{tpu_custom_call.1} parent=1 // pred_fallthru
      _
    %800 = vsyncpa [#allocation3], 1
    %801 = vsyncpa [#allocation4], 1

</llo_original>
